<compile_context>
chip_gen: v5e
topology: v5e:2x2
jax: 0.10.0
libtpu: 0.0.40
codegen_flags: <defaults>
</compile_context>

<pallas_src>
import math

import numpy as np
import jax
import jax.numpy as jnp
from jax.experimental import pallas as pl
from jax.experimental.pallas import tpu as pltpu


_TARGET_BLOCK_BYTES = 8 * 1024 * 1024     # ~8 MiB output block per grid step
_VMEM_LIMIT_BYTES = 40 * 1024 * 1024      # 2x8 MiB out + inputs, safe on v5e/v6e/v7x
_TARGET_CHUNK_LANES = 1024                # lane width of the replicated test chunk
_MAX_CHUNKS = 16                          # bounded unroll of the in-kernel sweep


def _round_up(x, m):
    return ((x + m - 1) // m) * m


def _sublane_quantum(itemsize):
    # f32 -> 8, bf16 -> 16, int8/fp8 -> 32 (sub-32-bit packs along sublanes)
    return max(8, 32 // int(itemsize))


# ---------------------------------------------------------------------------
# Kernels
# ---------------------------------------------------------------------------

def _diffs3d_kernel(test_ref, train_ref, out_ref):
    # test_ref : (tn, d)      tile of test rows
    # train_ref: (tm, d)      tile of train rows
    # out_ref  : (tn, tm, d)  pairwise differences (d % 128 == 0 -> lane-dense)
    out_ref[...] = test_ref[...][:, None, :] - train_ref[...][None, :, :]


def _make_flat_kernel(n_chunks, chunk_lane):
    # Lane-dense path (d % 128 != 0).  Output layout (n, m*d):
    #   out[a, b*d + k] = test[a, k] - train[b, k]
    # test_rep_ref: (tn, chunk_lane)        each test row replicated across one
    #                                        128-aligned chunk of lanes
    # train_ref   : (1,  n_chunks*chunk_lane) train rows flattened onto lanes
    # out_ref     : (tn, n_chunks*chunk_lane)
    def kernel(test_rep_ref, train_ref, out_ref):
        for c in range(n_chunks):                       # static, bounded unroll
            sl = slice(c * chunk_lane, (c + 1) * chunk_lane)
            out_ref[:, sl] = test_rep_ref[...] - train_ref[:, sl]
    return kernel


# ---------------------------------------------------------------------------
# Module wrapper
# ---------------------------------------------------------------------------

class PallasKernel:
    """JAX/Pallas port of the abstract `Kernel` base class."""

    def __init__(self, bandwidth=1.0):
        self.bandwidth = bandwidth

    # -- the only concrete compute of the base class -----------------------
    def _diffs(self, test_Xs, train_Xs, *, tile_n=None, tile_m=None):
        """Pairwise differences: out[i, j, ...] = test_Xs[i, ...] - train_Xs[j, ...]."""
        n = test_Xs.shape[0]
        m = train_Xs.shape[0]
        feat_shape = test_Xs.shape[1:]
        assert tuple(train_Xs.shape[1:]) == tuple(feat_shape), "feature shapes must match"
        d = int(np.prod(feat_shape)) if feat_shape else 1

        out_dtype = jnp.result_type(test_Xs.dtype, train_Xs.dtype)
        itemsize = jnp.dtype(out_dtype).itemsize

        # glue: flatten feature dims (metadata-only for row-major inputs)
        test_flat = test_Xs.reshape(n, d).astype(out_dtype)
        train_flat = train_Xs.reshape(m, d).astype(out_dtype)

        if d % 128 == 0:
            out = self._diffs_lane_aligned(test_flat, train_flat, n, m, d,
                                           itemsize, tile_n, tile_m)
        else:
            out = self._diffs_lane_dense(test_flat, train_flat, n, m, d,
                                         itemsize, tile_n, tile_m)
        return out.reshape(n, m, *feat_shape)

    # ---- d % 128 == 0: natural (N, M, D) layout is already lane-dense ----
    def _diffs_lane_aligned(self, test_flat, train_flat, n, m, d, itemsize,
                            tile_n, tile_m):
        sub_q = _sublane_quantum(itemsize)

        if tile_m is not None:
            tm = _round_up(max(int(tile_m), 1), sub_q)
        else:
            # Bias toward tn = sub_q and tm as large as the block budget allows
            # (long contiguous writeback runs; tm == full M -> fully contiguous
            # block writeback and the train tile is fetched exactly once).
            tm_cap = max(sub_q,
                         (_TARGET_BLOCK_BYTES // (sub_q * d * itemsize)) // sub_q * sub_q)
            tm = min(_round_up(m, sub_q), tm_cap)

        if tile_n is not None:
            tn = _round_up(max(int(tile_n), 1), sub_q)
        else:
            tn = sub_q
            if tm >= m:
                # Single train tile: spend leftover budget on more test rows,
                # but keep >= 2 leading-axis tiles for the v7x 2-TC split.
                grow = max(sub_q,
                           (_TARGET_BLOCK_BYTES // max(1, tm * d * itemsize)) // sub_q * sub_q)
                half_n = max(sub_q, _round_up(pl.cdiv(n, 2), sub_q))
                tn = min(_round_up(n, sub_q), grow, half_n)
        # TODO(synk): gigantic d (a single (sub_q, sub_q, d) block exceeding the
        # VMEM budget) would need a third grid axis tiling the feature dim; not
        # needed for KDE-like feature sizes.

        grid_i = pl.cdiv(n, tn)       # test-row tiles
        grid_j = pl.cdiv(m, tm)       # train-row tiles

        # Put the axis with more tiles first so megacore sharding stays busy.
        if grid_i >= grid_j:
            grid = (grid_i, grid_j)
            test_map = lambda i, j: (i, 0)
            train_map = lambda i, j: (j, 0)
            out_map = lambda i, j: (i, j, 0)
        else:
            grid = (grid_j, grid_i)
            test_map = lambda j, i: (i, 0)
            train_map = lambda j, i: (j, 0)
            out_map = lambda j, i: (i, j, 0)

        cost = pl.CostEstimate(
            flops=int(n * m * d),
            transcendentals=0,
            bytes_accessed=int(itemsize * (n * d + m * d + n * m * d)),
        )

        return pl.pallas_call(
            _diffs3d_kernel,
            out_shape=jax.ShapeDtypeStruct((n, m, d), test_flat.dtype),
            grid_spec=pltpu.PrefetchScalarGridSpec(
                num_scalar_prefetch=0,
                grid=grid,
                in_specs=[
                    pl.BlockSpec((tn, d), test_map),    # test tile
                    pl.BlockSpec((tm, d), train_map),   # train tile
                ],
                out_specs=pl.BlockSpec((tn, tm, d), out_map),
            ),
            compiler_params=pltpu.CompilerParams(
                dimension_semantics=("parallel", "parallel"),
                vmem_limit_bytes=_VMEM_LIMIT_BYTES,
            ),
            cost_estimate=cost,
        )(test_flat, train_flat)

    # ---- d % 128 != 0 (e.g. KDE, d = 1..8): flatten (train, feature) onto --
    # ---- the lane axis so every output store/DMA run is lane-dense        --
    def _diffs_lane_dense(self, test_flat, train_flat, n, m, d, itemsize,
                          tile_n, tile_m):
        sub_q = _sublane_quantum(itemsize)
        q = 128 // math.gcd(d, 128)        # train-tile quantum: tm*d % 128 == 0
        base = q * d                       # minimal 128-aligned, d-aligned chunk

        if tile_m is not None:
            tm = _round_up(max(int(tile_m), 1), q)
            chunk_lane = base
            n_chunks = tm // q
        else:
            cl_mult = max(1, min(_TARGET_CHUNK_LANES // base, pl.cdiv(m, q)))
            chunk_lane = base * cl_mult                        # ~<= 1024 lanes
            n_chunks = max(1, min(_MAX_CHUNKS, pl.cdiv(m * d, chunk_lane)))
            tm = (chunk_lane * n_chunks) // d
        lane = tm * d                                          # = chunk_lane * n_chunks

        if tile_n is not None:
            tn = _round_up(max(int(tile_n), 1), sub_q)
        else:
            tn = max(sub_q,
                     (_TARGET_BLOCK_BYTES // max(1, lane * itemsize)) // sub_q * sub_q)
            tn = min(tn, _round_up(n, sub_q))

        # Wrapper glue (tiny vs. the output): replicate each test row across ONE
        # chunk of lanes, and flatten the train rows onto the lane axis.
        test_rep = jnp.tile(test_flat, (1, chunk_lane // d))   # (n, chunk_lane)
        train_row = train_flat.reshape(1, m * d)               # (1, m*d)

        grid_i = pl.cdiv(n, tn)
        grid_j = pl.cdiv(m * d, lane)

        if grid_i >= grid_j:
            grid = (grid_i, grid_j)
            test_map = lambda i, j: (i, 0)
            train_map = lambda i, j: (0, j)
            out_map = lambda i, j: (i, j)
        else:
            grid = (grid_j, grid_i)
            test_map = lambda j, i: (i, 0)
            train_map = lambda j, i: (0, j)
            out_map = lambda j, i: (i, j)

        cost = pl.CostEstimate(
            flops=int(n * m * d),
            transcendentals=0,
            bytes_accessed=int(itemsize * (n * chunk_lane + m * d + n * m * d)),
        )

        out = pl.pallas_call(
            _make_flat_kernel(n_chunks, chunk_lane),
            out_shape=jax.ShapeDtypeStruct((n, m * d), test_rep.dtype),
            grid_spec=pltpu.PrefetchScalarGridSpec(
                num_scalar_prefetch=0,
                grid=grid,
                in_specs=[
                    pl.BlockSpec((tn, chunk_lane), test_map),   # replicated test chunk
                    pl.BlockSpec((1, lane), train_map),         # train lane slab
                ],
                out_specs=pl.BlockSpec((tn, lane), out_map),
            ),
            compiler_params=pltpu.CompilerParams(
                dimension_semantics=("parallel", "parallel"),
                vmem_limit_bytes=_VMEM_LIMIT_BYTES,
            ),
            cost_estimate=cost,
        )(test_rep, train_row)

        # (N, M*d) -> (N, M, d): row-major reshape, no padding to slice off.
        return out.reshape(n, m, d)

    # TODO(synk): `forward` (log p(x)) is abstract in the PyTorch base class —
    # a concrete subclass should fuse the kernel evaluation + logsumexp over
    # train tiles (online-softmax style) instead of materializing (N, M, D).
    def forward(self, test_Xs, train_Xs):
        raise NotImplementedError

    # TODO(synk): `sample` is abstract in the PyTorch base class.
    def sample(self, train_Xs):
        raise NotImplementedError


if __name__ == "__main__":
    key = jax.random.PRNGKey(0)
    kern = PallasKernel(bandwidth=1.0)

    cases = [
        # (test shape, train shape, dtype, tile overrides)
        ((16, 128), (24, 128), jnp.float32, {}),                         # lane-aligned, auto tiles
        ((20, 256), (40, 256), jnp.float32, dict(tile_n=8, tile_m=16)),  # lane-aligned, ragged 3x3 grid
        ((24, 128), (17, 128), jnp.bfloat16, {}),                        # bf16 -> 16-row sublane quantum
        ((10, 2, 3), (37, 2, 3), jnp.float32, {}),                       # small feature dims, lane-dense
        ((12, 4), (100, 4), jnp.float32, dict(tile_n=8, tile_m=32)),     # lane-dense, swapped grid order
        ((9,), (5,), jnp.float32, {}),                                   # scalar features (d == 1)
    ]

    for tshape, trshape, dt, tiles in cases:
        key, k1, k2 = jax.random.split(key, 3)
        test_Xs = jax.random.normal(k1, tshape, dtype=jnp.float32).astype(dt)
        train_Xs = jax.random.normal(k2, trshape, dtype=jnp.float32).astype(dt)

        diffs = jax.block_until_ready(kern._diffs(test_Xs, train_Xs, **tiles))

        # correctness check vs. plain-JAX broadcast (same semantics as the
        # PyTorch view/broadcast in Kernel._diffs)
        ref = test_Xs[:, None] - train_Xs[None, :]
        assert diffs.shape == ref.shape, (diffs.shape, ref.shape)
        np.testing.assert_allclose(
            np.asarray(diffs, dtype=np.float32),
            np.asarray(ref, dtype=np.float32),
            rtol=0, atol=0)

    print("KERNEL_OK")
</pallas_src>

<mosaic_0001>
module attributes {stable_mosaic.version = 11 : i64} {
  func.func @_diffs3d_kernel(%arg0: i32, %arg1: i32, %arg2: memref<8x128xf32, #tpu.memory_space<vmem>>, %arg3: memref<24x128xf32, #tpu.memory_space<vmem>>, %arg4: memref<8x24x128xf32, #tpu.memory_space<vmem>>) attributes {dimension_semantics = [#tpu.dimension_semantics<parallel>, #tpu.dimension_semantics<parallel>], iteration_bounds = array<i64: 2, 1>, scalar_prefetch = 0 : i64, scratch_operands = 0 : i64, tpu.core_type = #tpu.core_type<tc>, window_params = [{transform_indices = @transform_0, window_bounds = array<i64: 8, 128>}, {transform_indices = @transform_1, window_bounds = array<i64: 24, 128>}, {transform_indices = @transform_2, window_bounds = array<i64: 8, 24, 128>}]} {
    %c0 = arith.constant 0 : index
    %c0_0 = arith.constant 0 : index
    %0 = vector.load %arg2[%c0, %c0_0] : memref<8x128xf32, #tpu.memory_space<vmem>>, vector<8x128xf32>
    %1 = vector.shape_cast %0 : vector<8x128xf32> to vector<8x1x128xf32>
    %c0_1 = arith.constant 0 : index
    %c0_2 = arith.constant 0 : index
    %2 = vector.load %arg3[%c0_1, %c0_2] : memref<24x128xf32, #tpu.memory_space<vmem>>, vector<24x128xf32>
    %3 = vector.shape_cast %2 : vector<24x128xf32> to vector<1x24x128xf32>
    %4 = vector.broadcast %1 : vector<8x1x128xf32> to vector<8x24x128xf32>
    %5 = vector.broadcast %3 : vector<1x24x128xf32> to vector<8x24x128xf32>
    %6 = arith.subf %4, %5 : vector<8x24x128xf32>
    %c0_3 = arith.constant 0 : index
    %c0_4 = arith.constant 0 : index
    %c0_5 = arith.constant 0 : index
    %7 = vector.load %arg4[%c0_3, %c0_4, %c0_5] : memref<8x24x128xf32, #tpu.memory_space<vmem>>, vector<8x24x128xf32>
    tpu.vector_store %arg4[%c0_3, %c0_4, %c0_5], %6 {strides = array<i32>} : memref<8x24x128xf32, #tpu.memory_space<vmem>>, vector<8x24x128xf32>,
    return
  }
  func.func @transform_0(%arg0: i32, %arg1: i32) -> (i32, i32) {
    %c0_i32 = arith.constant 0 : i32
    %c0_i32_0 = arith.constant 0 : i32
    return %arg0, %c0_i32 : i32, i32
  }
  func.func @transform_1(%arg0: i32, %arg1: i32) -> (i32, i32) {
    %c0_i32 = arith.constant 0 : i32
    %c0_i32_0 = arith.constant 0 : i32
    return %arg1, %c0_i32 : i32, i32
  }
  func.func @transform_2(%arg0: i32, %arg1: i32) -> (i32, i32, i32) {
    %c0_i32 = arith.constant 0 : i32
    %c0_i32_0 = arith.constant 0 : i32
    return %arg0, %arg1, %c0_i32 : i32, i32, i32
  }
}

</mosaic_0001>

<llo_original>
// kernel: tpu_custom_call.1
$region0: #{tpu_custom_call.1}
  #allocation0 [shape = 'u32[]', space=smem, size = 0x4, offset = 0x4, fixed_abs, tag = 'smem constant byte address 0x4 - core index']
  #allocation1 [shape = 'u32[72,128]{1,0:T(1,128)}', space=vmem, size = 0x9000, scoped, tag = 'internal scratch']
  %s0 = inlined_call_operand.hbm [shape: f32[16,128], index: 0, kind: input, shape index: {}]
  %s1 = inlined_call_operand.hbm [shape: f32[24,128], index: 1, kind: input, shape index: {}]
  %s2 = inlined_call_operand.hbm [shape: f32[16,24,128], index: 2, kind: output, shape index: {}]
  %s3 = sld [smem:[#allocation0]]
  $region49: #{tpu_custom_call.1} parent=0
    _
  %s5 = ssub.s32 1, %s3
  %s6 = scalar_select 0, %s5, %s3
  $region1: #{tpu_custom_call.1} parent=0
    #allocation2 [shape = 'u8[8192]{0}', space=vmem, size = 0x2000, scoped, tag = 'input window, operand 0']
    #allocation3 [shape = 's32[2]{0}', space=sflag, size = 0x8, scoped, tag = 'scoped memory for tpu_custom_call.1']
    #allocation4 [shape = 's32[2]{0}', space=sflag, size = 0x8, scoped, tag = 'scoped memory for tpu_custom_call.1']
    #allocation5 [shape = 'u8[12288]{0}', space=vmem, size = 0x3000, scoped, tag = 'input window, operand 1, single buffered']
    #allocation6 [shape = 's32[1]{0}', space=sflag, size = 0x4, scoped, tag = 'scoped memory for tpu_custom_call.1']
    #allocation7 [shape = 'u8[196608]{0}', space=vmem, size = 0x30000, scoped, tag = 'output window, operand 0']
    %7 = vsyncpa [#allocation3], 0
    %s8 = scalar_lea.sflag [#allocation3], 1
    %9 = vsyncpa %s8, 0
    %10 = vsyncpa [#allocation6], 0
    %11 = vsyncpa [#allocation4], 0
    %s12 = scalar_lea.sflag [#allocation4], 1
    %13 = vsyncpa %s12, 0
    loop: start=0, step=1, limit=4
    $region2: #{tpu_custom_call.1} parent=1 // loop_pre_header
      _
    $region3: #{tpu_custom_call.1} parent=1 // loop_header
      %s15 = sphi 0, %s19
      %p16 = scmp.ge.s32.totalorder %s15, 4
      %s22 = sphi 0, %s34
      %s23 = sphi 0, %s30
      %s24 = sphi 0, %s22
      %s25 = sphi 0, %s23
      %s26 = sphi 0, %s24
      %s27 = sphi 0, %s25
      %s37 = sphi 0, %s39
      %s40 = sphi 0, %s37
      %s41 = sphi 0, %s40
      %s57 = sphi 0, %s41
      %s63 = sphi 0, %s65
      %s66 = sphi 0, %s63
      %s67 = sphi 0, %s66
      %s83 = sphi 0, %s67
      %s91 = sphi 0, %s93
      %s94 = sphi 0, %s91
      %s95 = sphi 0, %s94
      %s111 = sphi 0, %s95
    $region4: #{tpu_custom_call.1} parent=1 // loop_header_branch
      %18 = sbr.rel (%p16) target = $region8
    $region5: #{tpu_custom_call.1} parent=1 // loop_body
      %s20 = ssub.s32 %s15, 1
      %s21 = ssub.s32 %s15, 2
      %s28 = sadd.s32 1, %s23
      %p29 = scmp.ge.s32.totalorder %s28, 1
      %s30 = scalar_select %p29, 0, %s28
      %s31 = sadd.s32 1, %s22
      %s32 = scalar_select %p29, %s31, %s22
      %p33 = scmp.ge.s32.totalorder %s32, 2
      %s34 = scalar_select %p33, 0, %s32
      %s35 = ssub.s32 %s22, %s34
      %p36 = scmp.eq.s32.totalorder %s35, 0
      %s38 = sadd.s32 %s37, 1
      %s39 = scalar_select %p36, %s37, %s38
      %p42 = pneg %p36
      %p43 = scmp.eq.s32.totalorder %s15, 1
      %p44 = por %p42, %p43
      %p45 = scmp.ne.s32.totalorder %s37, %s40
      %p46 = scmp.eq.s32.totalorder %s15, 0
      %p47 = por %p45, %p46
      %p48 = scmp.ne.s32.totalorder %s37, %s40
      %p49 = scmp.eq.s32.totalorder %s20, 1
      %p50 = por %p48, %p49
      %p51 = scmp.ne.s32.totalorder %s40, %s41
      %p52 = scmp.eq.s32.totalorder %s20, 0
      %p53 = por %p51, %p52
      %p54 = scmp.ne.s32.totalorder %s40, %s41
      %p55 = scmp.eq.s32.totalorder %s21, 1
      %p56 = por %p54, %p55
      %p58 = scmp.ne.s32.totalorder %s41, %s57
      %p59 = scmp.eq.s32.totalorder %s21, 0
      %p60 = por %p58, %p59
      %s61 = ssub.s32 %s23, %s30
      %p62 = scmp.eq.s32.totalorder %s61, 0
      %s64 = sadd.s32 %s63, 1
      %s65 = scalar_select %p62, %s63, %s64
      %p68 = pneg %p62
      %p69 = scmp.eq.s32.totalorder %s15, 1
      %p70 = por %p68, %p69
      %p71 = scmp.ne.s32.totalorder %s63, %s66
      %p72 = scmp.eq.s32.totalorder %s15, 0
      %p73 = por %p71, %p72
      %p74 = scmp.ne.s32.totalorder %s63, %s66
      %p75 = scmp.eq.s32.totalorder %s20, 1
      %p76 = por %p74, %p75
      %p77 = scmp.ne.s32.totalorder %s66, %s67
      %p78 = scmp.eq.s32.totalorder %s20, 0
      %p79 = por %p77, %p78
      %p80 = scmp.ne.s32.totalorder %s66, %s67
      %p81 = scmp.eq.s32.totalorder %s21, 1
      %p82 = por %p80, %p81
      %p84 = scmp.ne.s32.totalorder %s67, %s83
      %p85 = scmp.eq.s32.totalorder %s21, 0
      %p86 = por %p84, %p85
      %s87 = ssub.s32 %s22, %s34
      %s88 = ssub.s32 %s23, %s30
      %s89 = sor.u32 %s87, %s88
      %p90 = scmp.eq.s32.totalorder %s89, 0
      %s92 = sadd.s32 %s91, 1
      %s93 = scalar_select %p90, %s91, %s92
      %p96 = pneg %p90
      %p97 = scmp.eq.s32.totalorder %s15, 1
      %p98 = por %p96, %p97
      %p99 = scmp.ne.s32.totalorder %s91, %s94
      %p100 = scmp.eq.s32.totalorder %s15, 0
      %p101 = por %p99, %p100
      %p102 = scmp.ne.s32.totalorder %s91, %s94
      %p103 = scmp.eq.s32.totalorder %s20, 1
      %p104 = por %p102, %p103
      %p105 = scmp.ne.s32.totalorder %s94, %s95
      %p106 = scmp.eq.s32.totalorder %s20, 0
      %p107 = por %p105, %p106
      %p108 = scmp.ne.s32.totalorder %s94, %s95
      %p109 = scmp.eq.s32.totalorder %s21, 1
      %p110 = por %p108, %p109
      %p112 = scmp.ne.s32.totalorder %s95, %s111
      %p113 = scmp.eq.s32.totalorder %s21, 0
      %p114 = por %p112, %p113
      %p115 = scmp.le.s32.totalorder 1, %s15
      %p116 = scmp.lt.s32.totalorder %s15, 3
      %p117 = pnand %p115, %p116
      %p118 = pneg %p117
      // Predicated region
      $region9: #{tpu_custom_call.1} parent=5 // pred_check
        _
      $region10: #{tpu_custom_call.1} parent=5 // pred_check_branch
        %120 = sbr.rel (%p117) target = $region12
      $region11: #{tpu_custom_call.1} parent=5 // pred_region
        %s121 = ssub.s32 %s15, 1
        // Predicated region
        $region13: #{tpu_custom_call.1} parent=11 // pred_check
          %p122 = pneg %p79
        $region14: #{tpu_custom_call.1} parent=11 // pred_check_branch
          %124 = sbr.rel (%p122) target = $region16
        $region15: #{tpu_custom_call.1} parent=11 // pred_region
          %s125 = smul.u32 3, %s25
          %127 = vsyncadd [#allocation6], 0
          %s128 = smul.addr %s125, 8
          %s129 = scalar_lea.hbm %s1, %s128
          %s130 = sshll.u32 %s129, 4
          %s131 = int_to_ptr.hbm [resolvable:$true] %s130
          %s132 = sshll.u32 [#allocation5], 4
          %s133 = int_to_ptr.vmem [resolvable:$true] %s132
          %138 = dma.hbm_to_vmem [thread:$0]  %s131, 384, %s133, [#allocation6], 128, 128, 8
        $region16: #{tpu_custom_call.1} parent=11 // pred_fallthru
          _
      $region12: #{tpu_custom_call.1} parent=5 // pred_fallthru
        _
      %p139 = scmp.lt.s32.totalorder %s15, 2
      // Predicated region
      $region17: #{tpu_custom_call.1} parent=5 // pred_check
        %p140 = pneg %p139
      $region18: #{tpu_custom_call.1} parent=5 // pred_check_branch
        %142 = sbr.rel (%p140) target = $region20
      $region19: #{tpu_custom_call.1} parent=5 // pred_region
        // Predicated region
        $region21: #{tpu_custom_call.1} parent=19 // pred_check
          %p143 = pneg %p47
        $region22: #{tpu_custom_call.1} parent=19 // pred_check_branch
          %145 = sbr.rel (%p143) target = $region24
        $region23: #{tpu_custom_call.1} parent=19 // pred_region
          %s146 = sand.u32 %s37, 1
          %s147 = scalar_lea.sflag [#allocation3], %s146
          %s148 = sand.u32 %s37, 1
          %s149 = smul.addr %s148, 8
          %s150 = scalar_lea.vmem [#allocation2], %s149
          %152 = vsyncadd %s147, 0
          %s153 = smul.addr %s22, 8
          %s154 = scalar_lea.hbm %s0, %s153
          %s156 = sshll.u32 %s154, 4
          %s157 = int_to_ptr.hbm [resolvable:$true] %s156
          %s158 = sshll.u32 %s150, 4
          %s159 = int_to_ptr.vmem [resolvable:$true] %s158
          %161 = dma.hbm_to_vmem [thread:$0]  %s157, 128, %s159, %s147
        $region24: #{tpu_custom_call.1} parent=19 // pred_fallthru
          _
      $region20: #{tpu_custom_call.1} parent=5 // pred_fallthru
        _
      %p162 = scmp.le.s32.totalorder 1, %s15
      %p163 = scmp.lt.s32.totalorder %s15, 3
      %p164 = pnand %p162, %p163
      %p165 = pneg %p164
      // Predicated region
      $region25: #{tpu_custom_call.1} parent=5 // pred_check
        _
      $region26: #{tpu_custom_call.1} parent=5 // pred_check_branch
        %167 = sbr.rel (%p164) target = $region28
      $region27: #{tpu_custom_call.1} parent=5 // pred_region
        %s168 = ssub.s32 %s15, 1
        %s169 = sand.u32 %s40, 1
        %s170 = scalar_lea.sflag [#allocation3], %s169
        %s171 = sand.u32 %s40, 1
        %s172 = smul.addr %s171, 8
        %s173 = scalar_lea.vmem [#allocation2], %s172
        // Predicated region
        $region29: #{tpu_custom_call.1} parent=27 // pred_check
          %p174 = pneg %p53
        $region30: #{tpu_custom_call.1} parent=27 // pred_check_branch
          %176 = sbr.rel (%p174) target = $region32
        $region31: #{tpu_custom_call.1} parent=27 // pred_region
          %178 = dma.done %s170, 128
        $region32: #{tpu_custom_call.1} parent=27 // pred_fallthru
          _
        // Predicated region
        $region33: #{tpu_custom_call.1} parent=27 // pred_check
          %p179 = pneg %p79
        $region34: #{tpu_custom_call.1} parent=27 // pred_check_branch
          %181 = sbr.rel (%p179) target = $region36
        $region35: #{tpu_custom_call.1} parent=27 // pred_region
          %183 = dma.done [#allocation6], 384
        $region36: #{tpu_custom_call.1} parent=27 // pred_fallthru
          _
        %s184 = sand.u32 %s40, 1
        %s185 = scalar_lea.sflag [#allocation3], %s184
        %s186 = sand.u32 %s40, 1
        %s187 = smul.addr %s186, 8
        %s188 = scalar_lea.vmem [#allocation2], %s187
        %p189 = pneg %p53
        %p190 = pneg %p50
        %p191 = pneg %p79
        %p192 = pneg %p76
        %p193 = pneg %p107
        %p194 = pneg %p104
        %s195 = sand.u32 %s94, 1
        %s196 = scalar_lea.sflag [#allocation4], %s195
        %s197 = sand.u32 %s94, 1
        %s198 = smul.addr %s197, 192
        %s199 = scalar_lea.vmem [#allocation7], %s198
        %s200 = smul.u32 3, %s25
        %s201 = smul.u32 8, %s24
        %s202 = smul.u32 3, %s25
        %v203 = vld [vmem:[%s173] sm:$0xff]
        %v205 = vrot.slane %v203, 1
        %v206 = vrot.slane %v203, 2
        %v207 = vrot.slane %v203, 3
        %v208 = vrot.slane %v203, 4
        %v209 = vrot.slane %v203, 5
        %v210 = vrot.slane %v203, 6
        %v211 = vrot.slane %v203, 7
        %v212 = vld [vmem:[#allocation5] sm:$0xff]
        %v213 = vld [vmem:[#allocation5 + $0x8] sm:$0xff]
        %v214 = vld [vmem:[#allocation5 + $0x10] sm:$0xff]
        %v215 = vperm.slane %v203, 0
        %v216 = vperm.slane %v205, 0
        %v217 = vperm.slane %v206, 0
        %v218 = vperm.slane %v207, 0
        %v219 = vperm.slane %v208, 0
        %v220 = vperm.slane %v209, 0
        %v221 = vperm.slane %v210, 0
        %v222 = vperm.slane %v211, 0
        %v231 = vsub.f32 %v215, %v212
        %v232 = vsub.f32 %v215, %v213
        %v233 = vsub.f32 %v215, %v214
        %v234 = vsub.f32 %v216, %v212
        %v235 = vsub.f32 %v216, %v213
        %v236 = vsub.f32 %v216, %v214
        %v237 = vsub.f32 %v217, %v212
        %v238 = vsub.f32 %v217, %v213
        %v239 = vsub.f32 %v217, %v214
        %v240 = vsub.f32 %v218, %v212
        %v241 = vsub.f32 %v218, %v213
        %v242 = vsub.f32 %v218, %v214
        %v243 = vsub.f32 %v219, %v212
        %v244 = vsub.f32 %v219, %v213
        %v245 = vsub.f32 %v219, %v214
        %v246 = vsub.f32 %v220, %v212
        %v247 = vsub.f32 %v220, %v213
        %v248 = vsub.f32 %v220, %v214
        %v249 = vsub.f32 %v221, %v212
        %v250 = vsub.f32 %v221, %v213
        %v251 = vsub.f32 %v221, %v214
        %v252 = vsub.f32 %v222, %v212
        %v253 = vsub.f32 %v222, %v213
        %v254 = vsub.f32 %v222, %v214
        %255 = vst [vmem:[%s199] sm:$0xff] %v231
        %256 = vst [vmem:[%s199 + $0x8] sm:$0xff] %v232
        %257 = vst [vmem:[%s199 + $0x10] sm:$0xff] %v233
        %258 = vst [vmem:[%s199 + $0x18] sm:$0xff] %v234
        %259 = vst [vmem:[%s199 + $0x20] sm:$0xff] %v235
        %260 = vst [vmem:[%s199 + $0x28] sm:$0xff] %v236
        %261 = vst [vmem:[%s199 + $0x30] sm:$0xff] %v237
        %262 = vst [vmem:[%s199 + $0x38] sm:$0xff] %v238
        %263 = vst [vmem:[%s199 + $0x40] sm:$0xff] %v239
        %264 = vst [vmem:[%s199 + $0x48] sm:$0xff] %v240
        %265 = vst [vmem:[%s199 + $0x50] sm:$0xff] %v241
        %266 = vst [vmem:[%s199 + $0x58] sm:$0xff] %v242
        %267 = vst [vmem:[%s199 + $0x60] sm:$0xff] %v243
        %268 = vst [vmem:[%s199 + $0x68] sm:$0xff] %v244
        %269 = vst [vmem:[%s199 + $0x70] sm:$0xff] %v245
        %270 = vst [vmem:[%s199 + $0x78] sm:$0xff] %v246
        %271 = vst [vmem:[%s199 + $0x80] sm:$0xff] %v247
        %272 = vst [vmem:[%s199 + $0x88] sm:$0xff] %v248
        %273 = vst [vmem:[%s199 + $0x90] sm:$0xff] %v249
        %274 = vst [vmem:[%s199 + $0x98] sm:$0xff] %v250
        %275 = vst [vmem:[%s199 + $0xa0] sm:$0xff] %v251
        %276 = vst [vmem:[%s199 + $0xa8] sm:$0xff] %v252
        %277 = vst [vmem:[%s199 + $0xb0] sm:$0xff] %v253
        %278 = vst [vmem:[%s199 + $0xb8] sm:$0xff] %v254
        %s279 = sand.u32 %s94, 1
        %s280 = scalar_lea.sflag [#allocation4], %s279
        %s281 = sand.u32 %s94, 1
        %s282 = smul.addr %s281, 192
        %s283 = scalar_lea.vmem [#allocation7], %s282
        // Predicated region
        $region37: #{tpu_custom_call.1} parent=27 // pred_check
          %p284 = pneg %p104
        $region38: #{tpu_custom_call.1} parent=27 // pred_check_branch
          %286 = sbr.rel (%p284) target = $region40
        $region39: #{tpu_custom_call.1} parent=27 // pred_region
          %s287 = smul.u32 8, %s24
          %s288 = smul.u32 3, %s25
          %290 = vsyncadd %s280, 0
          %s291 = smul.addr %s287, 3
          %s292 = sadd.s32 %s288, %s291
          %s293 = smul.addr %s292, 8
          %s294 = scalar_lea.hbm %s2, %s293
          %s295 = sshll.u32 %s283, 4
          %s296 = int_to_ptr.vmem [resolvable:$true] %s295
          %s297 = sshll.u32 %s294, 4
          %s298 = int_to_ptr.hbm [resolvable:$true] %s297
          %303 = dma.vmem_to_hbm [thread:$0]  %s296, 3072, %s298, %s280, 128, 128, 8
        $region40: #{tpu_custom_call.1} parent=27 // pred_fallthru
          _
      $region28: #{tpu_custom_call.1} parent=5 // pred_fallthru
        _
      %p304 = scmp.le.s32.totalorder 2, %s15
      // Predicated region
      $region41: #{tpu_custom_call.1} parent=5 // pred_check
        %p305 = pneg %p304
      $region42: #{tpu_custom_call.1} parent=5 // pred_check_branch
        %307 = sbr.rel (%p305) target = $region44
      $region43: #{tpu_custom_call.1} parent=5 // pred_region
        %s308 = ssub.s32 %s15, 2
        // Predicated region
        $region45: #{tpu_custom_call.1} parent=43 // pred_check
          %p309 = pneg %p110
        $region46: #{tpu_custom_call.1} parent=43 // pred_check_branch
          %311 = sbr.rel (%p309) target = $region48
        $region47: #{tpu_custom_call.1} parent=43 // pred_region
          %s312 = sand.u32 %s95, 1
          %s313 = scalar_lea.sflag [#allocation4], %s312
          %s314 = sand.u32 %s95, 1
          %s315 = smul.addr %s314, 192
          %s316 = scalar_lea.vmem [#allocation7], %s315
          %318 = dma.done %s313, 3072
        $region48: #{tpu_custom_call.1} parent=43 // pred_fallthru
          _
      $region44: #{tpu_custom_call.1} parent=5 // pred_fallthru
        _
    $region6: #{tpu_custom_call.1} parent=1 // loop_footer
      %s19 = sadd.s32 1, %s15
    $region7: #{tpu_custom_call.1} parent=1 // loop_footer_branch
      %14 = sbr.rel target = $region3
    $region8: #{tpu_custom_call.1} parent=1 // loop_exit
      _
    %319 = vsyncpa [#allocation3], 1
    %s320 = scalar_lea.sflag [#allocation3], 1
    %321 = vsyncpa %s320, 1
    %322 = vsyncpa [#allocation6], 1
    %323 = vsyncpa [#allocation4], 1
    %s324 = scalar_lea.sflag [#allocation4], 1
    %325 = vsyncpa %s324, 1

</llo_original>
